<compile_context>
chip_gen: v7x
topology: tpu7x:2x2x1
jax: 0.10.0
libtpu: 0.0.40
codegen_flags: <defaults>
</compile_context>

<pallas_src>
import jax
import jax.numpy as jnp
from jax.experimental import pallas as pl
from jax.experimental.pallas import tpu as pltpu


def _round_up(x, m):
    return -(-x // m) * m


def _round_down(x, m):
    return (x // m) * m


def _make_kernel(F, TF, needs_mask):
    def logreg_kernel(x_ref, w_ref, b_ref, o_ref, acc_ref):
        # x_ref: [TB, TF] (VMEM, streamed), w_ref: [1, TF] (VMEM),
        # b_ref: [1] (SMEM scalar), o_ref: [1, TB] (VMEM, lane-dense),
        # acc_ref: [1, TB] f32 scratch accumulator (resident across the F axis).
        k = pl.program_id(1)

        @pl.when(k == 0)
        def _init():
            acc_ref[...] = jnp.zeros_like(acc_ref)

        x = x_ref[...]
        w = w_ref[...]
        if needs_mask:
            # Ragged last F tile: zero out-of-range columns of BOTH operands so
            # padded (undefined) VMEM contents cannot reach the reduction.
            col = k * TF + jax.lax.broadcasted_iota(jnp.int32, (1, TF), 1)
            valid = col < F
            w = jnp.where(valid, w, jnp.zeros((), w.dtype))
            x = jnp.where(valid, x, jnp.zeros((), x.dtype))

        # w[1,TF] . x[TB,TF]^T (contract the F axes) -> [1, TB] on the MXU.
        acc_ref[...] += jax.lax.dot_general(
            w, x,
            dimension_numbers=(((1,), (1,)), ((), ())),
            preferred_element_type=jnp.float32,
        )

        @pl.when(k == pl.num_programs(1) - 1)
        def _finalize():
            z = acc_ref[...] + b_ref[0]                          # scalar bias from SMEM
            o_ref[...] = jax.nn.sigmoid(z).astype(o_ref.dtype)   # logistic on EUP

    return logreg_kernel


def _plan_tiles(B, F, itemsize, per_buffer_budget):
    """Pick (TB, TF) so one x block's lane/sublane-PADDED VMEM footprint fits
    per_buffer_budget (the pipeline double-buffers it)."""
    sub = 8 * max(1, 4 // itemsize)      # sublane multiple: 8 for f32, 16 for bf16
    lane_F = _round_up(F, 128)           # F < 128 still occupies a full 128-lane tile

    rows = per_buffer_budget // (lane_F * itemsize)
    if rows >= B:
        return B, F                      # whole batch + whole F in one resident block

    if rows >= 128:
        TB = _round_down(rows, 128)      # tiled TB must be 128-aligned (lane-dense out)
        # v7x megacore: keep the "parallel" axis at >= 4 steps when B allows it.
        if pl.cdiv(B, TB) in (2, 3) and B >= 4 * 128:
            TB = max(128, _round_down(pl.cdiv(B, 4), 128))
        return TB, F

    # F so large that even a 128-row tile exceeds the budget: split F as well.
    TB = min(128, B)
    TF = _round_down(per_buffer_budget // (_round_up(TB, sub) * itemsize), 128)
    TF = max(128, min(TF, _round_down(F, 128)))
    return TB, TF


def logistic_regression(x, w, b):
    """x: [B, F] (f32 or bf16), w: [1, F] (torch nn.Linear layout), b: [1] -> [B, 1] f32."""
    B, F = x.shape
    assert w.shape == (1, F) and b.shape == (1,)
    w = w.astype(x.dtype)               # tiny; keep MXU operand dtypes matched
    b = b.astype(jnp.float32)           # 32-bit scalar in SMEM
    itemsize = jnp.dtype(x.dtype).itemsize

    try:
        vmem_cap = int(pltpu.get_tpu_info().vmem_capacity_bytes)
    except Exception:
        vmem_cap = 64 * 1024 * 1024     # smallest per-TC VMEM across supported gens (v7x)

    # ~4 MiB per x buffer on v7x (64 MiB VMEM), ~8 MiB on v5e/v6e (128 MiB).
    per_buffer_budget = min(8 << 20, vmem_cap // 16)

    TB, TF = _plan_tiles(B, F, itemsize, per_buffer_budget)
    nb = pl.cdiv(B, TB)
    nk = pl.cdiv(F, TF)
    needs_mask = (F % TF) != 0

    # Padded-VMEM accounting for the explicit vmem limit (double-buffered specs).
    x_buf = _round_up(TB, 8 * max(1, 4 // itemsize)) * _round_up(TF, 128) * itemsize
    o_buf = 8 * _round_up(TB, 128) * 4
    w_buf = 8 * _round_up(TF, 128) * itemsize
    acc_buf = 8 * _round_up(TB, 128) * 4
    needed = 2 * x_buf + 2 * o_buf + 2 * w_buf + acc_buf + (2 << 20)
    vmem_limit = int(min(max(needed, 16 << 20), int(vmem_cap * 0.75)))

    out = pl.pallas_call(
        _make_kernel(F, TF, needs_mask),
        out_shape=jax.ShapeDtypeStruct((1, B), jnp.float32),
        grid=(nb, nk),
        in_specs=[
            pl.BlockSpec((TB, TF), lambda i, k: (i, k)),           # x: streamed
            pl.BlockSpec((1, TF), lambda i, k: (0, k)),            # w: tiny, per-F-tile
            pl.BlockSpec(memory_space=pltpu.MemorySpace.SMEM),     # b: scalar in SMEM
        ],
        out_specs=pl.BlockSpec((1, TB), lambda i, k: (0, i)),      # lane-dense output slab
        scratch_shapes=[pltpu.VMEM((1, TB), jnp.float32)],         # f32 accumulator
        compiler_params=pltpu.CompilerParams(
            dimension_semantics=("parallel", "arbitrary"),
            vmem_limit_bytes=vmem_limit,
        ),
        cost_estimate=pl.CostEstimate(
            flops=2 * B * F,
            transcendentals=B,
            bytes_accessed=B * F * itemsize + F * itemsize + 4 + B * 4,
        ),
    )(x, w, b)
    return out.reshape(B, 1)


if __name__ == "__main__":
    key = jax.random.PRNGKey(0)
    kx, kw, kb = jax.random.split(key, 3)

    B, F = 8, 32  # batch, n_inp_features

    x = jax.random.normal(kx, (B, F), dtype=jnp.float32)

    # Params mimic nn.Linear(F, 1): weight [1, F], bias [1], uniform(+-1/sqrt(F)).
    bound = 1.0 / jnp.sqrt(jnp.float32(F))
    w = jax.random.uniform(kw, (1, F), minval=-bound, maxval=bound, dtype=jnp.float32)
    b = jax.random.uniform(kb, (1,), minval=-bound, maxval=bound, dtype=jnp.float32)

    y = jax.block_until_ready(logistic_regression(x, w, b))

    # Reference in plain JAX (same math as torch.sigmoid(self.lin(x))).
    y_ref = jax.nn.sigmoid(x @ w.T + b)
    assert y.shape == (B, 1)
    assert jnp.allclose(y, y_ref, atol=1e-5, rtol=1e-5)

    print("KERNEL_OK")
</pallas_src>

<mosaic_0001>
module attributes {stable_mosaic.version = 11 : i64} {
  func.func @logreg_kernel(%arg0: i32, %arg1: i32, %arg2: memref<8x32xf32, #tpu.memory_space<vmem>>, %arg3: memref<1x32xf32, #tpu.memory_space<vmem>>, %arg4: memref<1xf32, #tpu.memory_space<smem>>, %arg5: memref<1x8xf32, #tpu.memory_space<vmem>>, %arg6: memref<1x8xf32, #tpu.memory_space<vmem>>) attributes {dimension_semantics = [#tpu.dimension_semantics<parallel>, #tpu.dimension_semantics<arbitrary>], iteration_bounds = array<i64: 1, 1>, scalar_prefetch = 0 : i64, scratch_operands = 1 : i64, tpu.core_type = #tpu.core_type<tc>, window_params = [{transform_indices = @transform_0, window_bounds = array<i64: 8, 32>}, {transform_indices = @transform_1, window_bounds = array<i64: 1, 32>}, {transform_indices = @transform_2, window_bounds = array<i64: 1>}, {transform_indices = @transform_3, window_bounds = array<i64: 1, 8>}]} {
    %c0_i32 = arith.constant 0 : i32
    %0 = arith.cmpi eq, %arg1, %c0_i32 : i32
    %1 = arith.extui %0 : i1 to i32
    %c0_i32_0 = arith.constant 0 : i32
    %2 = arith.cmpi ne, %1, %c0_i32_0 : i32
    scf.if %2 {
      %cst_10 = arith.constant 0.000000e+00 : f32
      %12 = vector.broadcast %cst_10 : f32 to vector<1x8xf32>
      %c0_11 = arith.constant 0 : index
      %c0_12 = arith.constant 0 : index
      %13 = vector.load %arg6[%c0_11, %c0_12] : memref<1x8xf32, #tpu.memory_space<vmem>>, vector<1x8xf32>
      tpu.vector_store %arg6[%c0_11, %c0_12], %12 {strides = array<i32>} : memref<1x8xf32, #tpu.memory_space<vmem>>, vector<1x8xf32>,
    } else {
    }
    %c0 = arith.constant 0 : index
    %c0_1 = arith.constant 0 : index
    %3 = vector.load %arg2[%c0, %c0_1] : memref<8x32xf32, #tpu.memory_space<vmem>>, vector<8x32xf32>
    %c0_2 = arith.constant 0 : index
    %c0_3 = arith.constant 0 : index
    %4 = vector.load %arg3[%c0_2, %c0_3] : memref<1x32xf32, #tpu.memory_space<vmem>>, vector<1x32xf32>
    %c0_4 = arith.constant 0 : index
    %c0_5 = arith.constant 0 : index
    %5 = vector.load %arg6[%c0_4, %c0_5] : memref<1x8xf32, #tpu.memory_space<vmem>>, vector<1x8xf32>
    %cst = arith.constant dense<0.000000e+00> : vector<1x8xf32>
    %6 = tpu.matmul %4, %3, %cst {dimension_numbers = #tpu.dot_dimension_numbers<[1], [1], [0], [0], [0, 0, 1, 0], [], []>} : vector<1x32xf32>, vector<8x32xf32>, vector<1x8xf32> -> vector<1x8xf32>
    %7 = arith.addf %5, %6 : vector<1x8xf32>
    %c0_6 = arith.constant 0 : index
    %c0_7 = arith.constant 0 : index
    %8 = vector.load %arg6[%c0_6, %c0_7] : memref<1x8xf32, #tpu.memory_space<vmem>>, vector<1x8xf32>
    tpu.vector_store %arg6[%c0_6, %c0_7], %7 {strides = array<i32>} : memref<1x8xf32, #tpu.memory_space<vmem>>, vector<1x8xf32>,
    %c0_i32_8 = arith.constant 0 : i32
    %9 = arith.cmpi eq, %arg1, %c0_i32_8 : i32
    %10 = arith.extui %9 : i1 to i32
    %c0_i32_9 = arith.constant 0 : i32
    %11 = arith.cmpi ne, %10, %c0_i32_9 : i32
    scf.if %11 {
      %c0_10 = arith.constant 0 : index
      %c0_11 = arith.constant 0 : index
      %12 = vector.load %arg6[%c0_10, %c0_11] : memref<1x8xf32, #tpu.memory_space<vmem>>, vector<1x8xf32>
      %c0_12 = arith.constant 0 : index
      %13 = memref.load %arg4[%c0_12] : memref<1xf32, #tpu.memory_space<smem>>
      %14 = vector.broadcast %13 : f32 to vector<1x8xf32>
      %15 = arith.addf %12, %14 : vector<1x8xf32>
      %16 = arith.negf %15 : vector<1x8xf32>
      %17 = math.exp %16 : vector<1x8xf32>
      %cst_13 = arith.constant 1.000000e+00 : f32
      %18 = vector.broadcast %cst_13 : f32 to vector<1x8xf32>
      %19 = arith.addf %18, %17 : vector<1x8xf32>
      %20 = arith.divf %18, %19 : vector<1x8xf32>
      %c0_14 = arith.constant 0 : index
      %c0_15 = arith.constant 0 : index
      %21 = vector.load %arg5[%c0_14, %c0_15] : memref<1x8xf32, #tpu.memory_space<vmem>>, vector<1x8xf32>
      tpu.vector_store %arg5[%c0_14, %c0_15], %20 {strides = array<i32>} : memref<1x8xf32, #tpu.memory_space<vmem>>, vector<1x8xf32>,
    } else {
    }
    return
  }
  func.func @transform_0(%arg0: i32, %arg1: i32) -> (i32, i32) {
    %c0_i32 = arith.constant 0 : i32
    return %arg0, %arg1 : i32, i32
  }
  func.func @transform_1(%arg0: i32, %arg1: i32) -> (i32, i32) {
    %c0_i32 = arith.constant 0 : i32
    %c0_i32_0 = arith.constant 0 : i32
    return %c0_i32, %arg1 : i32, i32
  }
  func.func @transform_2(%arg0: i32, %arg1: i32) -> i32 {
    %c0_i32 = arith.constant 0 : i32
    %c0_i32_0 = arith.constant 0 : i32
    return %c0_i32 : i32
  }
  func.func @transform_3(%arg0: i32, %arg1: i32) -> (i32, i32) {
    %c0_i32 = arith.constant 0 : i32
    %c0_i32_0 = arith.constant 0 : i32
    return %c0_i32, %arg0 : i32, i32
  }
}

</mosaic_0001>

<llo_original>
// kernel: tpu_custom_call.1
$region0: #{tpu_custom_call.1}
  #allocation0 [shape = 'u32[]', space=smem, size = 0x4, offset = 0x4, fixed_abs, tag = 'smem constant byte address 0x4 - core index']
  #allocation1 [shape = 'u32[144,128]{1,0:T(1,128)}', space=vmem, size = 0x12000, scoped, tag = 'internal scratch']
  #allocation2 [shape = 'f32[1,8]{1,0:T(1,128)}', space=vmem, size = 0x200, scoped, tag = 'scratch operand']
  #allocation3 [shape = 'f32[1]{0:T(128)S(6)}', space=smem, size = 0x200, scoped, tag = 'scoped memory for tpu_custom_call.1']
  %s0 = inlined_call_operand.hbm [shape: f32[8,32], index: 0, kind: input, shape index: {}]
  %s1 = inlined_call_operand.vmem [shape: f32[1,32], index: 1, kind: input, shape index: {}]
  %s2 = inlined_call_operand.<no memory space> [shape: f32[1], index: 2, kind: input, shape index: {}]
  %s3 = inlined_call_operand.hbm [shape: f32[1,8], index: 3, kind: output, shape index: {}]
  %s4 = sld [smem:[#allocation0]]
  $region34: #{tpu_custom_call.1} parent=0
    _
  %s6 = ssub.s32 1, %s4
  %s7 = scalar_select 0, %s6, %s4
  %8 = sst [smem:[#allocation3]] %s2
  $region1: #{tpu_custom_call.1} parent=0
    #allocation4 [shape = 'u8[4096]{0}', space=vmem, size = 0x1000, scoped, tag = 'input window, operand 0, single buffered']
    #allocation5 [shape = 's32[1]{0}', space=sflag, size = 0x4, scoped, tag = 'scoped memory for tpu_custom_call.1']
    #allocation6 [shape = 's32[1]{0}', space=sflag, size = 0x4, scoped, tag = 'scoped memory for tpu_custom_call.1']
    #allocation7 [shape = 'u8[512]{0}', space=vmem, size = 0x400, scoped, tag = 'output window, operand 0, single buffered']
    %9 = vsyncpa [#allocation5], 0
    %10 = vsyncpa [#allocation6], 0
    // Predicated region
    $region2: #{tpu_custom_call.1} parent=1 // pred_check
      _
    $region3: #{tpu_custom_call.1} parent=1 // pred_check_branch
      %12 = sbr.rel (0) target = $region5
    $region4: #{tpu_custom_call.1} parent=1 // pred_region
      %s14 = ssub.s32 128, 128
      %15 = vsyncadd [#allocation5], %s14
      %s17 = sshll.u32 [#allocation4], 4
      %s18 = int_to_ptr.vmem [resolvable:$true] %s17
      %20 = dma.hbm_to_vmem [thread:$0]  %s0, 128, %s18, [#allocation5]
    $region5: #{tpu_custom_call.1} parent=1 // pred_fallthru
      _
    // Predicated region
    $region6: #{tpu_custom_call.1} parent=1 // pred_check
      _
    $region7: #{tpu_custom_call.1} parent=1 // pred_check_branch
      %22 = sbr.rel (0) target = $region9
    $region8: #{tpu_custom_call.1} parent=1 // pred_region
      _
    $region9: #{tpu_custom_call.1} parent=1 // pred_fallthru
      _
    // Predicated region
    $region10: #{tpu_custom_call.1} parent=1 // pred_check
      _
    $region11: #{tpu_custom_call.1} parent=1 // pred_check_branch
      %24 = sbr.rel (0) target = $region13
    $region12: #{tpu_custom_call.1} parent=1 // pred_region
      _
    $region13: #{tpu_custom_call.1} parent=1 // pred_fallthru
      _
    // Predicated region
    $region14: #{tpu_custom_call.1} parent=1 // pred_check
      _
    $region15: #{tpu_custom_call.1} parent=1 // pred_check_branch
      %26 = sbr.rel (0) target = $region17
    $region16: #{tpu_custom_call.1} parent=1 // pred_region
      %27 = dma.done [#allocation5], 128
    $region17: #{tpu_custom_call.1} parent=1 // pred_fallthru
      _
    %p28 = scmp.eq.s32.totalorder 0, 0
    // Predicated region
    $region18: #{tpu_custom_call.1} parent=1 // pred_check
      %p29 = pneg %p28
    $region19: #{tpu_custom_call.1} parent=1 // pred_check_branch
      %31 = sbr.rel (%p29) target = $region21
    $region20: #{tpu_custom_call.1} parent=1 // pred_region
      %vm32 = vcmask 57344
      %33 = vst.msk [vmem:[#allocation2] sm:$0x1] %vm32, 0.0
    $region21: #{tpu_custom_call.1} parent=1 // pred_fallthru
      _
    %v34 = vld [vmem:[#allocation4] sm:$0xff]
    %v35 = vld [vmem:[%s1] sm:$0x1]
    %v36 = vld [vmem:[#allocation2] sm:$0x1]
    %vm37 = vcmask 261120
    %v39 = vsel %vm37, %v35, 0
    %v42 = vsel %vm37, %v34, 0
    %44 = vmatprep.subr.mxu0 0.0
    %45 = vmatpush1.xpose.msra.mxu0 %v42
    %46 = vmatprep.subr.mxu0 0.0
    %47 = vmatpush1.xpose.msra.mxu0 0.0
    %48 = vmatprep.subr.mxu0 0.0
    %49 = vmatpush1.xpose.msra.mxu0 0.0
    %50 = vmatprep.subr.mxu0 0.0
    %51 = vmatpush1.xpose.msra.mxu0 0.0
    %52 = vmatprep.subr.mxu0 0.0
    %53 = vmatpush1.xpose.msra.mxu0 0.0
    %54 = vmatprep.subr.mxu0 0.0
    %55 = vmatpush1.xpose.msra.mxu0 0.0
    %56 = vmatprep.subr.mxu0 0.0
    %57 = vmatpush1.xpose.msra.mxu0 0.0
    %58 = vmatprep.subr.mxu0 0.0
    %59 = vmatpush1.xpose.msra.mxu0 0.0
    %60 = vmatprep.subr.mxu0 0.0
    %61 = vmatpush1.xpose.msra.mxu0 0.0
    %62 = vmatprep.subr.mxu0 0.0
    %63 = vmatpush1.xpose.msra.mxu0 0.0
    %64 = vmatprep.subr.mxu0 0.0
    %65 = vmatpush1.xpose.msra.mxu0 0.0
    %66 = vmatprep.subr.mxu0 0.0
    %67 = vmatpush1.xpose.msra.mxu0 0.0
    %68 = vmatprep.subr.mxu0 0.0
    %69 = vmatpush1.xpose.msra.mxu0 0.0
    %70 = vmatprep.subr.mxu0 0.0
    %71 = vmatpush1.xpose.msra.mxu0 0.0
    %72 = vmatprep.subr.mxu0 0.0
    %73 = vmatpush1.xpose.msra.mxu0 0.0
    %74 = vmatprep.subr.mxu0 0.0
    %75 = vmatpush1.xpose.msra.mxu0 0.0
    %76 = vmatprep.subr.mxu0 0.0
    %77 = vmatpush1.xpose.msra.mxu0 0.0
    %78 = vmatprep.subr.mxu0 0.0
    %79 = vmatpush1.xpose.msra.mxu0 0.0
    %80 = vmatprep.subr.mxu0 0.0
    %81 = vmatpush1.xpose.msra.mxu0 0.0
    %82 = vmatprep.subr.mxu0 0.0
    %83 = vmatpush1.xpose.msra.mxu0 0.0
    %84 = vmatprep.subr.mxu0 0.0
    %85 = vmatpush1.xpose.msra.mxu0 0.0
    %86 = vmatprep.subr.mxu0 0.0
    %87 = vmatpush1.xpose.msra.mxu0 0.0
    %88 = vmatprep.subr.mxu0 0.0
    %89 = vmatpush1.xpose.msra.mxu0 0.0
    %90 = vmatprep.subr.mxu0 0.0
    %91 = vmatpush1.xpose.msra.mxu0 0.0
    %92 = vmatprep.subr.mxu0 0.0
    %93 = vmatpush1.xpose.msra.mxu0 0.0
    %94 = vmatprep.subr.mxu0 0.0
    %95 = vmatpush1.xpose.msra.mxu0 0.0
    %96 = vmatprep.subr.mxu0 0.0
    %97 = vmatpush1.xpose.msra.mxu0 0.0
    %98 = vmatprep.subr.mxu0 0.0
    %99 = vmatpush1.xpose.msra.mxu0 0.0
    %100 = vmatprep.subr.mxu0 0.0
    %101 = vmatpush1.xpose.msra.mxu0 0.0
    %102 = vmatprep.subr.mxu0 0.0
    %103 = vmatpush1.xpose.msra.mxu0 0.0
    %104 = vmatprep.subr.mxu0 0.0
    %105 = vmatpush1.xpose.msra.mxu0 0.0
    %106 = vmatprep.subr.mxu0 0.0
    %107 = vmatpush1.xpose.msra.mxu0 0.0
    %108 = vmatprep.mubr.f32.mxu0 0.0
    %109 = vmatmul.mubr.f32.gmra.mrb[0].mxu0 %v39
    %v110 = vpop.f32.mrb[0].mxu0
    %v111 = vadd.f32 0.0, %v110
    %v112 = vpop.f32.mrb[0].mxu0
    %113 = vdwg.mxu0
    %v114 = vadd.f32 %v36, %v111
    %vm115 = vcmask 57344
    %116 = vst.msk [vmem:[#allocation2] sm:$0x1] %vm115, %v114
    // Predicated region
    $region22: #{tpu_custom_call.1} parent=1 // pred_check
      %p117 = pneg %p28
    $region23: #{tpu_custom_call.1} parent=1 // pred_check_branch
      %119 = sbr.rel (%p117) target = $region25
    $region24: #{tpu_custom_call.1} parent=1 // pred_region
      %v120 = vld [vmem:[#allocation2] sm:$0x1]
      %s121 = sld [smem:[#allocation3]]
      %v122 = vstv %s121
      %v123 = vadd.f32 %v120, %v122
      %v124 = vxor.u32 %v123, 2147483648
      %v125 = vmul.f32 %v124, 1.442695
      %v126 = vpow.pop %v125
      %v127 = vadd.f32 %v126, 1.0
      %v128 = vrcp.pop %v127
      %v129 = vmul.f32 1.0, %v128
      %130 = vst.msk [vmem:[#allocation7] sm:$0x1] %vm115, %v129
    $region25: #{tpu_custom_call.1} parent=1 // pred_fallthru
      _
    // Predicated region
    $region26: #{tpu_custom_call.1} parent=1 // pred_check
      _
    $region27: #{tpu_custom_call.1} parent=1 // pred_check_branch
      %132 = sbr.rel (0) target = $region29
    $region28: #{tpu_custom_call.1} parent=1 // pred_region
      %s134 = ssub.s32 16, 16
      %135 = vsyncadd [#allocation6], %s134
      %s137 = sshll.u32 [#allocation7], 4
      %s138 = int_to_ptr.vmem [resolvable:$true] %s137
      %140 = dma.vmem_to_hbm [thread:$0]  %s138, 16, %s3, [#allocation6]
    $region29: #{tpu_custom_call.1} parent=1 // pred_fallthru
      _
    // Predicated region
    $region30: #{tpu_custom_call.1} parent=1 // pred_check
      _
    $region31: #{tpu_custom_call.1} parent=1 // pred_check_branch
      %142 = sbr.rel (0) target = $region33
    $region32: #{tpu_custom_call.1} parent=1 // pred_region
      %143 = dma.done [#allocation6], 16
    $region33: #{tpu_custom_call.1} parent=1 // pred_fallthru
      _
    %144 = vsyncpa [#allocation5], 1
    %145 = vsyncpa [#allocation6], 1

</llo_original>
